<compile_context>
chip_gen: v6e
topology: v6e:2x2x1
jax: 0.10.0
libtpu: 0.0.40
codegen_flags: <defaults>
</compile_context>

<pallas_src>
import jax
import jax.numpy as jnp
from jax.experimental import pallas as pl
from jax.experimental.pallas import tpu as pltpu


def _round_up(x, m):
    return (x + m - 1) // m * m


def _phase_matmul_kernel(w_ref, b_ref, x_ref, o_ref):
    """One spatial-lane-tile grid step: out = W @ X + b.

    w_ref: (CoP, K)    phase-scattered transposed-conv weight (VMEM resident)
    b_ref: (CoP, 1)    per-phase-channel bias (VMEM resident)
    x_ref: (K, tM)     im2col'd input patches, batch*spatial on lanes
    o_ref: (CoP, tM)   lane-dense output tile
    """
    acc = jnp.dot(w_ref[...], x_ref[...], preferred_element_type=jnp.float32)
    o_ref[...] = (acc + b_ref[...]).astype(o_ref.dtype)


def srf_conv_transpose2d(x_nchw, weight, bias, *, stride=1, padding=0,
                         output_padding=0, dilation=1, compute_dtype=None):
    """ConvTranspose2d forward (groups=1), NCHW in / NCHW out."""
    N, Ci, H, W = x_nchw.shape
    Ci_w, Co, kH, kW = weight.shape
    assert Ci_w == Ci
    s, p, op, d = int(stride), int(padding), int(output_padding), int(dilation)

    Hout = (H - 1) * s - 2 * p + d * (kH - 1) + op + 1
    Wout = (W - 1) * s - 2 * p + d * (kW - 1) + op + 1
    Qh = -(-Hout // s)          # per-phase output grid (ceil)
    Qw = -(-Wout // s)

    # ---- per-axis phase taps: which kernel taps hit which phase, at which
    #      input offset t (sub-pixel decomposition; no inserted zeros) ----
    def taps(k):
        per_phase = []
        for r in range(s):
            per_phase.append([(kk, (r + p - kk * d) // s)
                              for kk in range(k)
                              if (r + p - kk * d) % s == 0])
        ts = [t for ph in per_phase for (_, t) in ph]
        return per_phase, min(ts), max(ts)

    taps_h, tlo_h, thi_h = taps(kH)
    taps_w, tlo_w, thi_w = taps(kW)
    PH = thi_h - tlo_h + 1
    PW = thi_w - tlo_w + 1

    pad_top = max(0, -tlo_h)
    pad_left = max(0, -tlo_w)
    pad_bot = max(0, Qh + thi_h - H)
    pad_right = max(0, Qw + thi_w - W)
    base_h = tlo_h + pad_top            # >= 0 by construction
    base_w = tlo_w + pad_left

    # ---- wrapper-side layout (one-time XLA data movement) ----
    x_pad = jnp.pad(x_nchw, ((0, 0), (0, 0),
                             (pad_top, pad_bot), (pad_left, pad_right)))
    patches = []
    for jh in range(PH):
        for jw in range(PW):
            patches.append(x_pad[:, :, base_h + jh:base_h + jh + Qh,
                                       base_w + jw:base_w + jw + Qw])
    # (N, Ci, PH*PW, Qh, Qw) -> (Ci*PH*PW, N*Qh*Qw): batch+spatial on lanes
    xp = jnp.stack(patches, axis=2)
    xp = jnp.transpose(xp, (1, 2, 0, 3, 4)).reshape(Ci * PH * PW,
                                                    N * Qh * Qw)

    K = Ci * PH * PW
    M = N * Qh * Qw
    CoP = s * s * Co

    # phase-scattered weight: wp[ry, rx, co, ci, jh, jw]
    wp = jnp.zeros((s, s, Co, Ci, PH, PW), weight.dtype)
    for ry in range(s):
        for (kh, th) in taps_h[ry]:
            jh = th - tlo_h
            for rx in range(s):
                for (kw, tw) in taps_w[rx]:
                    jw = tw - tlo_w
                    wp = wp.at[ry, rx, :, :, jh, jw].set(weight[:, :, kh, kw].T)
    w_t = wp.reshape(CoP, K)
    b_p = jnp.tile(bias, s * s).reshape(CoP, 1)

    # ---- pad to TPU-friendly tile sizes ----
    K_p = _round_up(K, 8)
    Co_p = _round_up(CoP, 8)
    m_aligned = _round_up(M, 128)

    # Lane tile: multiple of 128, capped both at 1024 lanes and by a VMEM
    # budget (x tile + out tile, double-buffered) so we stay comfortably
    # under the default scoped-VMEM limit on v5e/v6e/v7x without overrides.
    vmem_budget = 24 * 1024 * 1024
    per_lane_bytes = (K_p + Co_p) * 4 * 2          # 2x for double buffering
    tm_budget = max(128, (vmem_budget // per_lane_bytes) // 128 * 128)
    tm = min(m_aligned, 1024, tm_budget)
    M_p = _round_up(m_aligned, tm)

    xp = jnp.pad(xp, ((0, K_p - K), (0, M_p - M)))
    w_t = jnp.pad(w_t, ((0, Co_p - CoP), (0, K_p - K)))
    b_p = jnp.pad(b_p, ((0, Co_p - CoP), (0, 0)))

    if compute_dtype is not None:       # e.g. jnp.bfloat16 on v6e/v7x
        xp = xp.astype(compute_dtype)
        w_t = w_t.astype(compute_dtype)

    grid = (M_p // tm,)

    out_p = pl.pallas_call(
        _phase_matmul_kernel,
        out_shape=jax.ShapeDtypeStruct((Co_p, M_p), x_nchw.dtype),
        grid_spec=pltpu.PrefetchScalarGridSpec(
            num_scalar_prefetch=0,
            grid=grid,
            in_specs=[
                # constant index maps -> fetched once, kept resident in VMEM
                pl.BlockSpec((Co_p, K_p), lambda m: (0, 0)),
                pl.BlockSpec((Co_p, 1), lambda m: (0, 0)),
                pl.BlockSpec((K_p, tm), lambda m: (0, m)),
            ],
            out_specs=pl.BlockSpec((Co_p, tm), lambda m: (0, m)),
        ),
        compiler_params=pltpu.CompilerParams(
            dimension_semantics=("parallel",)),
    )(w_t, b_p, xp)

    # ---- pixel-shuffle phases back to NCHW and crop to the true size ----
    out = out_p[:CoP, :M].reshape(s, s, Co, N, Qh, Qw)
    out = jnp.transpose(out, (3, 2, 4, 0, 5, 1))   # (N, Co, Qh, ry, Qw, rx)
    out = out.reshape(N, Co, Qh * s, Qw * s)
    return out[:, :, :Hout, :Wout]


def _reference(x_nchw, weight, bias, *, stride, padding, output_padding,
               dilation):
    """Plain-JAX ConvTranspose2d reference (lhs-dilated conv)."""
    Ci, Co, kH, kW = weight.shape
    s, d, p, op = stride, dilation, padding, output_padding
    ph, pw = d * (kH - 1) - p, d * (kW - 1) - p
    w_oihw = jnp.transpose(weight, (1, 0, 2, 3))[:, :, ::-1, ::-1]
    out = jax.lax.conv_general_dilated(
        x_nchw, w_oihw,
        window_strides=(1, 1),
        padding=((ph, ph + op), (pw, pw + op)),
        lhs_dilation=(s, s),
        rhs_dilation=(d, d),
        dimension_numbers=("NCHW", "OIHW", "NCHW"))
    return out + bias[None, :, None, None]


if __name__ == "__main__":
    # Module configuration (SrfConvTranspose2dCompat(4, 8, 3, stride=2,
    # padding=1, output_padding=1)): a typical 2x upsampling transposed conv.
    in_channels, out_channels = 4, 8
    kernel_size, stride, padding, output_padding, dilation = 3, 2, 1, 1, 1

    key = jax.random.PRNGKey(0)
    kx, kw, kb = jax.random.split(key, 3)

    x = jax.random.normal(kx, (2, in_channels, 16, 16), dtype=jnp.float32)
    # ConvTranspose2d weight layout: (in_channels, out_channels, kH, kW)
    fan = in_channels * kernel_size * kernel_size
    weight = jax.random.normal(
        kw, (in_channels, out_channels, kernel_size, kernel_size),
        dtype=jnp.float32) * (1.0 / fan ** 0.5)
    bias = jax.random.normal(kb, (out_channels,), dtype=jnp.float32) * 0.1

    out = srf_conv_transpose2d(
        x, weight, bias, stride=stride, padding=padding,
        output_padding=output_padding, dilation=dilation)
    out = jax.block_until_ready(out)

    ref = _reference(x, weight, bias, stride=stride, padding=padding,
                     output_padding=output_padding, dilation=dilation)
    ref = jax.block_until_ready(ref)

    assert out.shape == (2, out_channels, 32, 32), out.shape
    if not jnp.allclose(out, ref, atol=1e-4, rtol=1e-4):
        raise AssertionError("Pallas result does not match reference")

    print("KERNEL_OK")
</pallas_src>

<mosaic_0001>
module attributes {stable_mosaic.version = 11 : i64} {
  func.func @_phase_matmul_kernel(%arg0: i32, %arg1: memref<32x16xf32, #tpu.memory_space<vmem>>, %arg2: memref<32x1xf32, #tpu.memory_space<vmem>>, %arg3: memref<16x512xf32, #tpu.memory_space<vmem>>, %arg4: memref<32x512xf32, #tpu.memory_space<vmem>>) attributes {dimension_semantics = [#tpu.dimension_semantics<parallel>], iteration_bounds = array<i64: 1>, scalar_prefetch = 0 : i64, scratch_operands = 0 : i64, tpu.core_type = #tpu.core_type<tc>, window_params = [{pipeline_mode = #tpu.pipeline_mode<synchronous>, transform_indices = @transform_0, window_bounds = array<i64: 32, 16>}, {pipeline_mode = #tpu.pipeline_mode<synchronous>, transform_indices = @transform_1, window_bounds = array<i64: 32, 1>}, {transform_indices = @transform_2, window_bounds = array<i64: 16, 512>}, {transform_indices = @transform_3, window_bounds = array<i64: 32, 512>}]} {
    %c0 = arith.constant 0 : index
    %c0_0 = arith.constant 0 : index
    %0 = vector.load %arg1[%c0, %c0_0] : memref<32x16xf32, #tpu.memory_space<vmem>>, vector<32x16xf32>
    %c0_1 = arith.constant 0 : index
    %c0_2 = arith.constant 0 : index
    %1 = vector.load %arg3[%c0_1, %c0_2] : memref<16x512xf32, #tpu.memory_space<vmem>>, vector<16x512xf32>
    %cst = arith.constant dense<0.000000e+00> : vector<32x512xf32>
    %2 = tpu.matmul %0, %1, %cst {dimension_numbers = #tpu.dot_dimension_numbers<[1], [0], [0], [1], [0, 0, 1, 1], [], []>} : vector<32x16xf32>, vector<16x512xf32>, vector<32x512xf32> -> vector<32x512xf32>
    %c0_3 = arith.constant 0 : index
    %c0_4 = arith.constant 0 : index
    %3 = vector.load %arg2[%c0_3, %c0_4] : memref<32x1xf32, #tpu.memory_space<vmem>>, vector<32x1xf32>
    %4 = vector.broadcast %3 : vector<32x1xf32> to vector<32x512xf32>
    %5 = arith.addf %2, %4 : vector<32x512xf32>
    %c0_5 = arith.constant 0 : index
    %c0_6 = arith.constant 0 : index
    %6 = vector.load %arg4[%c0_5, %c0_6] : memref<32x512xf32, #tpu.memory_space<vmem>>, vector<32x512xf32>
    tpu.vector_store %arg4[%c0_5, %c0_6], %5 {strides = array<i32>} : memref<32x512xf32, #tpu.memory_space<vmem>>, vector<32x512xf32>,
    return
  }
  func.func @transform_0(%arg0: i32) -> (i32, i32) {
    %c0_i32 = arith.constant 0 : i32
    %c0_i32_0 = arith.constant 0 : i32
    %c0_i32_1 = arith.constant 0 : i32
    return %c0_i32, %c0_i32_0 : i32, i32
  }
  func.func @transform_1(%arg0: i32) -> (i32, i32) {
    %c0_i32 = arith.constant 0 : i32
    %c0_i32_0 = arith.constant 0 : i32
    %c0_i32_1 = arith.constant 0 : i32
    return %c0_i32, %c0_i32_0 : i32, i32
  }
  func.func @transform_2(%arg0: i32) -> (i32, i32) {
    %c0_i32 = arith.constant 0 : i32
    %c0_i32_0 = arith.constant 0 : i32
    return %c0_i32, %arg0 : i32, i32
  }
  func.func @transform_3(%arg0: i32) -> (i32, i32) {
    %c0_i32 = arith.constant 0 : i32
    %c0_i32_0 = arith.constant 0 : i32
    return %c0_i32, %arg0 : i32, i32
  }
}

</mosaic_0001>

<llo_original>
// kernel: tpu_custom_call.1
$region0: #{tpu_custom_call.1}
  #allocation0 [shape = 'u32[]', space=smem, size = 0x4, offset = 0x4, fixed_abs, tag = 'smem constant byte address 0x4 - core index']
  #allocation1 [shape = 'u32[144,128]{1,0:T(1,128)}', space=vmem, size = 0x12000, scoped, tag = 'internal scratch']
  %s0 = inlined_call_operand.vmem [shape: f32[32,16], index: 0, kind: input, shape index: {}]
  %s1 = inlined_call_operand.vmem [shape: f32[32,1], index: 1, kind: input, shape index: {}]
  %s2 = inlined_call_operand.vmem [shape: f32[16,512], index: 2, kind: input, shape index: {}]
  %s3 = inlined_call_operand.hbm [shape: f32[32,512], index: 3, kind: output, shape index: {}]
  %s4 = sld [smem:[#allocation0]]
  $region22: #{tpu_custom_call.1} parent=0
    _
  %s6 = ssub.s32 1, %s4
  %s7 = scalar_select 0, %s6, %s4
  $region1: #{tpu_custom_call.1} parent=0
    #allocation2 [shape = 'u8[65536]{0}', space=vmem, size = 0x10000, scoped, tag = 'output window, operand 0, single buffered']
    #allocation3 [shape = 's32[1]{0}', space=sflag, size = 0x4, scoped, tag = 'scoped memory for tpu_custom_call.1']
    %8 = vsyncpa [#allocation3], 0
    // Predicated region
    $region2: #{tpu_custom_call.1} parent=1 // pred_check
      _
    $region3: #{tpu_custom_call.1} parent=1 // pred_check_branch
      %10 = sbr.rel (0) target = $region5
    $region4: #{tpu_custom_call.1} parent=1 // pred_region
      _
    $region5: #{tpu_custom_call.1} parent=1 // pred_fallthru
      _
    // Predicated region
    $region6: #{tpu_custom_call.1} parent=1 // pred_check
      _
    $region7: #{tpu_custom_call.1} parent=1 // pred_check_branch
      %12 = sbr.rel (0) target = $region9
    $region8: #{tpu_custom_call.1} parent=1 // pred_region
      _
    $region9: #{tpu_custom_call.1} parent=1 // pred_fallthru
      _
    // Predicated region
    $region10: #{tpu_custom_call.1} parent=1 // pred_check
      _
    $region11: #{tpu_custom_call.1} parent=1 // pred_check_branch
      %14 = sbr.rel (0) target = $region13
    $region12: #{tpu_custom_call.1} parent=1 // pred_region
      _
    $region13: #{tpu_custom_call.1} parent=1 // pred_fallthru
      _
    %v15 = vld [vmem:[%s0] sm:$0xff]
    %v16 = vld [vmem:[%s0 + $0x8] sm:$0xff]
    %v17 = vld [vmem:[%s0 + $0x10] sm:$0xff]
    %v18 = vld [vmem:[%s0 + $0x18] sm:$0xff]
    %v19 = vld [vmem:[%s2] sm:$0xff]
    %v20 = vld [vmem:[%s2 + $0x8] sm:$0xff]
    %v21 = vld [vmem:[%s2 + $0x10] sm:$0xff]
    %v22 = vld [vmem:[%s2 + $0x18] sm:$0xff]
    %v23 = vld [vmem:[%s2 + $0x20] sm:$0xff]
    %v24 = vld [vmem:[%s2 + $0x28] sm:$0xff]
    %v25 = vld [vmem:[%s2 + $0x30] sm:$0xff]
    %v26 = vld [vmem:[%s2 + $0x38] sm:$0xff]
    %v27 = vld [vmem:[%s1] sm:$0xff]
    %v28 = vld [vmem:[%s1 + $0x8] sm:$0xff]
    %v29 = vld [vmem:[%s1 + $0x10] sm:$0xff]
    %v30 = vld [vmem:[%s1 + $0x18] sm:$0xff]
    %32 = vset.pattern.permute.xlu0 0
    %33 = vperm.xlu0 %32, %v27
    %v34 = vpop.permute.xlu0 %33
    %37 = vset.pattern.permute.xlu0 0
    %38 = vperm.xlu0 %37, %v28
    %v39 = vpop.permute.xlu0 %38
    %42 = vset.pattern.permute.xlu0 0
    %43 = vperm.xlu0 %42, %v29
    %v44 = vpop.permute.xlu0 %43
    %47 = vset.pattern.permute.xlu0 0
    %48 = vperm.xlu0 %47, %v30
    %v49 = vpop.permute.xlu0 %48
    %vm51 = vcmask 130048
    %v53 = vsel %vm51, %v15, 0
    %v56 = vsel %vm51, %v16, 0
    %v59 = vsel %vm51, %v17, 0
    %v62 = vsel %vm51, %v18, 0
    %64 = vmatprep.subr.mxu0 0.0
    %65 = vmatpush1.msra.mxu0 0.0
    %66 = vmatprep.subr.mxu0 0.0
    %67 = vmatpush1.msra.mxu0 0.0
    %68 = vmatprep.subr.mxu0 0.0
    %69 = vmatpush1.msra.mxu0 0.0
    %70 = vmatprep.subr.mxu0 0.0
    %71 = vmatpush1.msra.mxu0 0.0
    %72 = vmatprep.subr.mxu0 0.0
    %73 = vmatpush1.msra.mxu0 0.0
    %74 = vmatprep.subr.mxu0 0.0
    %75 = vmatpush1.msra.mxu0 0.0
    %76 = vmatprep.subr.mxu0 0.0
    %77 = vmatpush1.msra.mxu0 0.0
    %78 = vmatprep.subr.mxu0 0.0
    %79 = vmatpush1.msra.mxu0 0.0
    %80 = vmatprep.subr.mxu0 0.0
    %81 = vmatpush1.msra.mxu0 0.0
    %82 = vmatprep.subr.mxu0 0.0
    %83 = vmatpush1.msra.mxu0 0.0
    %84 = vmatprep.subr.mxu0 0.0
    %85 = vmatpush1.msra.mxu0 0.0
    %86 = vmatprep.subr.mxu0 0.0
    %87 = vmatpush1.msra.mxu0 0.0
    %88 = vmatprep.subr.mxu0 0.0
    %89 = vmatpush1.msra.mxu0 0.0
    %90 = vmatprep.subr.mxu0 0.0
    %91 = vmatpush1.msra.mxu0 0.0
    %92 = vmatprep.subr.mxu0 %v24
    %93 = vmatpush1.msra.mxu0 %v23
    %94 = vmatprep.subr.mxu0 %v20
    %95 = vmatpush1.msra.mxu0 %v19
    %96 = vmatprep.subr.mxu0 0.0
    %97 = vmatpush2.msra.mxu0 0.0
    %98 = vmatprep.subr.mxu0 0.0
    %99 = vmatpush2.msra.mxu0 0.0
    %100 = vmatprep.subr.mxu0 0.0
    %101 = vmatpush2.msra.mxu0 0.0
    %102 = vmatprep.subr.mxu0 0.0
    %103 = vmatpush2.msra.mxu0 0.0
    %104 = vmatprep.subr.mxu0 0.0
    %105 = vmatpush2.msra.mxu0 0.0
    %106 = vmatprep.subr.mxu0 0.0
    %107 = vmatpush2.msra.mxu0 0.0
    %108 = vmatprep.subr.mxu0 0.0
    %109 = vmatpush2.msra.mxu0 0.0
    %110 = vmatprep.subr.mxu0 0.0
    %111 = vmatpush2.msra.mxu0 0.0
    %112 = vmatprep.subr.mxu0 0.0
    %113 = vmatpush2.msra.mxu0 0.0
    %114 = vmatprep.subr.mxu0 0.0
    %115 = vmatpush2.msra.mxu0 0.0
    %116 = vmatprep.subr.mxu0 0.0
    %117 = vmatpush2.msra.mxu0 0.0
    %118 = vmatprep.subr.mxu0 0.0
    %119 = vmatpush2.msra.mxu0 0.0
    %120 = vmatprep.subr.mxu0 0.0
    %121 = vmatpush2.msra.mxu0 0.0
    %122 = vmatprep.subr.mxu0 0.0
    %123 = vmatpush2.msra.mxu0 0.0
    %124 = vmatprep.subr.mxu0 0.0
    %125 = vmatpush2.msra.mxu0 0.0
    %126 = vmatprep.subr.mxu0 0.0
    %127 = vmatpush2.msra.mxu0 0.0
    %128 = vmatprep.mubr.f32.mxu0 0.0
    %129 = vmatmul.mubr.f32.gmra.mxu0 %v53
    %v130 = vpop.f32.mrf.mxu0
    %v131 = vadd.f32 %v34, %v130
    %v132 = vpop.f32.mrf.mxu0
    %v133 = vadd.f32 %v34, %v132
    %134 = vmatprep.mubr.f32.mxu0 0.0
    %135 = vmatmul.mubr.f32.gmra.mxu0 %v56
    %v136 = vpop.f32.mrf.mxu0
    %v137 = vadd.f32 %v39, %v136
    %v138 = vpop.f32.mrf.mxu0
    %v139 = vadd.f32 %v39, %v138
    %140 = vmatprep.mubr.f32.mxu0 0.0
    %141 = vmatmul.mubr.f32.gmra.mxu0 %v59
    %v142 = vpop.f32.mrf.mxu0
    %v143 = vadd.f32 %v44, %v142
    %v144 = vpop.f32.mrf.mxu0
    %v145 = vadd.f32 %v44, %v144
    %146 = vmatprep.mubr.f32.mxu0 0.0
    %147 = vmatmul.mubr.f32.gmra.mxu0 %v62
    %v148 = vpop.f32.mrf.mxu0
    %v149 = vadd.f32 %v49, %v148
    %v150 = vpop.f32.mrf.mxu0
    %v151 = vadd.f32 %v49, %v150
    %152 = vdwg.mxu0
    %153 = vmatprep.subr.mxu0 0.0
    %154 = vmatpush1.msra.mxu0 0.0
    %155 = vmatprep.subr.mxu0 0.0
    %156 = vmatpush1.msra.mxu0 0.0
    %157 = vmatprep.subr.mxu0 0.0
    %158 = vmatpush1.msra.mxu0 0.0
    %159 = vmatprep.subr.mxu0 0.0
    %160 = vmatpush1.msra.mxu0 0.0
    %161 = vmatprep.subr.mxu0 0.0
    %162 = vmatpush1.msra.mxu0 0.0
    %163 = vmatprep.subr.mxu0 0.0
    %164 = vmatpush1.msra.mxu0 0.0
    %165 = vmatprep.subr.mxu0 0.0
    %166 = vmatpush1.msra.mxu0 0.0
    %167 = vmatprep.subr.mxu0 0.0
    %168 = vmatpush1.msra.mxu0 0.0
    %169 = vmatprep.subr.mxu0 0.0
    %170 = vmatpush1.msra.mxu0 0.0
    %171 = vmatprep.subr.mxu0 0.0
    %172 = vmatpush1.msra.mxu0 0.0
    %173 = vmatprep.subr.mxu0 0.0
    %174 = vmatpush1.msra.mxu0 0.0
    %175 = vmatprep.subr.mxu0 0.0
    %176 = vmatpush1.msra.mxu0 0.0
    %177 = vmatprep.subr.mxu0 0.0
    %178 = vmatpush1.msra.mxu0 0.0
    %179 = vmatprep.subr.mxu0 0.0
    %180 = vmatpush1.msra.mxu0 0.0
    %181 = vmatprep.subr.mxu0 %v26
    %182 = vmatpush1.msra.mxu0 %v25
    %183 = vmatprep.subr.mxu0 %v22
    %184 = vmatpush1.msra.mxu0 %v21
    %185 = vmatprep.subr.mxu0 0.0
    %186 = vmatpush2.msra.mxu0 0.0
    %187 = vmatprep.subr.mxu0 0.0
    %188 = vmatpush2.msra.mxu0 0.0
    %189 = vmatprep.subr.mxu0 0.0
    %190 = vmatpush2.msra.mxu0 0.0
    %191 = vmatprep.subr.mxu0 0.0
    %192 = vmatpush2.msra.mxu0 0.0
    %193 = vmatprep.subr.mxu0 0.0
    %194 = vmatpush2.msra.mxu0 0.0
    %195 = vmatprep.subr.mxu0 0.0
    %196 = vmatpush2.msra.mxu0 0.0
    %197 = vmatprep.subr.mxu0 0.0
    %198 = vmatpush2.msra.mxu0 0.0
    %199 = vmatprep.subr.mxu0 0.0
    %200 = vmatpush2.msra.mxu0 0.0
    %201 = vmatprep.subr.mxu0 0.0
    %202 = vmatpush2.msra.mxu0 0.0
    %203 = vmatprep.subr.mxu0 0.0
    %204 = vmatpush2.msra.mxu0 0.0
    %205 = vmatprep.subr.mxu0 0.0
    %206 = vmatpush2.msra.mxu0 0.0
    %207 = vmatprep.subr.mxu0 0.0
    %208 = vmatpush2.msra.mxu0 0.0
    %209 = vmatprep.subr.mxu0 0.0
    %210 = vmatpush2.msra.mxu0 0.0
    %211 = vmatprep.subr.mxu0 0.0
    %212 = vmatpush2.msra.mxu0 0.0
    %213 = vmatprep.subr.mxu0 0.0
    %214 = vmatpush2.msra.mxu0 0.0
    %215 = vmatprep.subr.mxu0 0.0
    %216 = vmatpush2.msra.mxu0 0.0
    %217 = vmatprep.mubr.f32.mxu0 0.0
    %218 = vmatmul.mubr.f32.gmra.mxu0 %v53
    %v219 = vpop.f32.mrf.mxu0
    %v220 = vadd.f32 %v34, %v219
    %v221 = vpop.f32.mrf.mxu0
    %v222 = vadd.f32 %v34, %v221
    %223 = vmatprep.mubr.f32.mxu0 0.0
    %224 = vmatmul.mubr.f32.gmra.mxu0 %v56
    %v225 = vpop.f32.mrf.mxu0
    %v226 = vadd.f32 %v39, %v225
    %v227 = vpop.f32.mrf.mxu0
    %v228 = vadd.f32 %v39, %v227
    %229 = vmatprep.mubr.f32.mxu0 0.0
    %230 = vmatmul.mubr.f32.gmra.mxu0 %v59
    %v231 = vpop.f32.mrf.mxu0
    %v232 = vadd.f32 %v44, %v231
    %v233 = vpop.f32.mrf.mxu0
    %v234 = vadd.f32 %v44, %v233
    %235 = vmatprep.mubr.f32.mxu0 0.0
    %236 = vmatmul.mubr.f32.gmra.mxu0 %v62
    %v237 = vpop.f32.mrf.mxu0
    %v238 = vadd.f32 %v49, %v237
    %v239 = vpop.f32.mrf.mxu0
    %v240 = vadd.f32 %v49, %v239
    %241 = vdwg.mxu0
    %242 = vst [vmem:[#allocation2] sm:$0xff] %v131
    %243 = vst [vmem:[#allocation2 + $0x8] sm:$0xff] %v133
    %244 = vst [vmem:[#allocation2 + $0x10] sm:$0xff] %v220
    %245 = vst [vmem:[#allocation2 + $0x18] sm:$0xff] %v222
    %246 = vst [vmem:[#allocation2 + $0x20] sm:$0xff] %v137
    %247 = vst [vmem:[#allocation2 + $0x28] sm:$0xff] %v139
    %248 = vst [vmem:[#allocation2 + $0x30] sm:$0xff] %v226
    %249 = vst [vmem:[#allocation2 + $0x38] sm:$0xff] %v228
    %250 = vst [vmem:[#allocation2 + $0x40] sm:$0xff] %v143
    %251 = vst [vmem:[#allocation2 + $0x48] sm:$0xff] %v145
    %252 = vst [vmem:[#allocation2 + $0x50] sm:$0xff] %v232
    %253 = vst [vmem:[#allocation2 + $0x58] sm:$0xff] %v234
    %254 = vst [vmem:[#allocation2 + $0x60] sm:$0xff] %v149
    %255 = vst [vmem:[#allocation2 + $0x68] sm:$0xff] %v151
    %256 = vst [vmem:[#allocation2 + $0x70] sm:$0xff] %v238
    %257 = vst [vmem:[#allocation2 + $0x78] sm:$0xff] %v240
    // Predicated region
    $region14: #{tpu_custom_call.1} parent=1 // pred_check
      _
    $region15: #{tpu_custom_call.1} parent=1 // pred_check_branch
      %259 = sbr.rel (0) target = $region17
    $region16: #{tpu_custom_call.1} parent=1 // pred_region
      %s261 = ssub.s32 2048, 2048
      %262 = vsyncadd [#allocation3], %s261
      %s263 = sshll.u32 [#allocation2], 4
      %s264 = int_to_ptr.vmem [resolvable:$true] %s263
      %269 = dma.vmem_to_hbm [thread:$0]  %s264, 2048, %s3, [#allocation3], 512, 512, 32
    $region17: #{tpu_custom_call.1} parent=1 // pred_fallthru
      _
    // Predicated region
    $region18: #{tpu_custom_call.1} parent=1 // pred_check
      _
    $region19: #{tpu_custom_call.1} parent=1 // pred_check_branch
      %271 = sbr.rel (0) target = $region21
    $region20: #{tpu_custom_call.1} parent=1 // pred_region
      %272 = dma.done [#allocation3], 2048
    $region21: #{tpu_custom_call.1} parent=1 // pred_fallthru
      _
    %273 = vsyncpa [#allocation3], 1

</llo_original>
